<compile_context>
chip_gen: v7x
topology: tpu7x:2x2x1
jax: 0.10.0
libtpu: 0.0.40
codegen_flags: <defaults>
</compile_context>

<pallas_src>
import jax
import jax.numpy as jnp
from jax.experimental import pallas as pl
from jax.experimental.pallas import tpu as pltpu


def _round_up(x, m):
    return ((x + m - 1) // m) * m


def actor_critic_kernel(x_ref, w1_ref, b1_ref, w2_ref, b2_ref, wh_ref, bh_ref, o_ref):
    # x streams per batch tile in f32; cast to bf16 in-kernel for the MXU.
    x = x_ref[...].astype(jnp.bfloat16)                               # (TB, D)

    # trunk layer 1: Linear(in, 32) + ReLU   (bf16 MXU, f32 accumulate / bias / ReLU)
    h1 = jnp.dot(x, w1_ref[...], preferred_element_type=jnp.float32) + b1_ref[...]
    h1 = jnp.maximum(h1, 0.0).astype(jnp.bfloat16)

    # trunk layer 2: Linear(32, 16) + ReLU
    h2 = jnp.dot(h1, w2_ref[...], preferred_element_type=jnp.float32) + b2_ref[...]
    h2 = jnp.maximum(h2, 0.0).astype(jnp.bfloat16)

    # fused heads: [actor_mu | actor_sigma | critic | small zero-pad] -> (TB, HP) f32
    o_ref[...] = jnp.dot(h2, wh_ref[...], preferred_element_type=jnp.float32) + bh_ref[...]


def pack_actor_critic_params(w1, b1, w2, b2, w_mu, b_mu, w_sigma, b_sigma, w_c, b_c):
    """One-time packing/casting of parameters (hoisted out of the forward path)."""
    A = w_mu.shape[1]
    C = w_c.shape[1]
    NH = 2 * A + C
    HP = max(8, _round_up(NH, 8))               # narrow padded head width (8, not 128)

    wh = jnp.zeros((w2.shape[1], HP), jnp.float32).at[:, :NH].set(
        jnp.concatenate([w_mu, w_sigma, w_c], axis=1))
    bh = jnp.zeros((1, HP), jnp.float32).at[:, :NH].set(
        jnp.concatenate([b_mu, b_sigma, b_c], axis=1))

    packed = (
        w1.astype(jnp.bfloat16),
        b1.astype(jnp.float32),
        w2.astype(jnp.bfloat16),
        b2.astype(jnp.float32),
        wh.astype(jnp.bfloat16),
        bh.astype(jnp.float32),
    )
    return packed, (A, C, HP)


def actor_critic_forward(x, packed_params, *, tb=2048):
    """Returns (actor_mu, actor_sigma, critic) like the PyTorch module's forward."""
    (w1b, b1f, w2b, b2f, whb, bhf), (A, C, HP) = packed_params
    B, D = x.shape
    H1 = w1b.shape[1]
    H2 = w2b.shape[1]

    # Batch tile: multiple of 8 sublanes; keep >= 2 grid steps when B allows so both
    # v7x TensorCores get work under dimension_semantics=("parallel",).
    half = max(8, _round_up(pl.cdiv(_round_up(B, 8), 2), 8))
    tb = min(tb, half)
    grid_n = pl.cdiv(B, tb)

    # Explicitly pad the batch so every tile is fully backed by real (zeroed) data.
    B_grid = grid_n * tb
    if B_grid != B:
        x = jnp.pad(x, ((0, B_grid - B), (0, 0)))

    out = pl.pallas_call(
        actor_critic_kernel,
        out_shape=jax.ShapeDtypeStruct((B_grid, HP), jnp.float32),
        grid=(grid_n,),
        in_specs=[
            pl.BlockSpec((tb, D), lambda i: (i, 0)),     # x: streamed over batch (f32)
            pl.BlockSpec((D, H1), lambda i: (0, 0)),     # resident weights/biases
            pl.BlockSpec((1, H1), lambda i: (0, 0)),
            pl.BlockSpec((H1, H2), lambda i: (0, 0)),
            pl.BlockSpec((1, H2), lambda i: (0, 0)),
            pl.BlockSpec((H2, HP), lambda i: (0, 0)),
            pl.BlockSpec((1, HP), lambda i: (0, 0)),
        ],
        out_specs=pl.BlockSpec((tb, HP), lambda i: (i, 0)),
        compiler_params=pltpu.CompilerParams(
            dimension_semantics=("parallel",)),          # shard batch over v7x's 2 TCs
    )(x, w1b, b1f, w2b, b2f, whb, bhf)

    actor_mu = out[:B, :A]
    actor_sigma = out[:B, A:2 * A]
    critic = out[:B, 2 * A:2 * A + C]
    return actor_mu, actor_sigma, critic


def actor_critic_ref(x, w1, b1, w2, b2, w_mu, b_mu, w_sigma, b_sigma, w_c, b_c):
    """Pure-JAX reference mirroring the kernel's precision (bf16 MXU, f32 accumulate)."""
    xb = x.astype(jnp.bfloat16)
    h1 = jnp.maximum(
        jnp.dot(xb, w1.astype(jnp.bfloat16), preferred_element_type=jnp.float32) + b1, 0.0
    ).astype(jnp.bfloat16)
    h2 = jnp.maximum(
        jnp.dot(h1, w2.astype(jnp.bfloat16), preferred_element_type=jnp.float32) + b2, 0.0
    ).astype(jnp.bfloat16)
    mu = jnp.dot(h2, w_mu.astype(jnp.bfloat16), preferred_element_type=jnp.float32) + b_mu
    sigma = jnp.dot(h2, w_sigma.astype(jnp.bfloat16), preferred_element_type=jnp.float32) + b_sigma
    value = jnp.dot(h2, w_c.astype(jnp.bfloat16), preferred_element_type=jnp.float32) + b_c
    return mu, sigma, value


def init_params(key, in_dim, actor_shape, critic_shape):
    """Deterministic synthetic parameters, shapes matching the torch module (transposed)."""
    ks = jax.random.split(key, 10)
    w1 = jax.random.normal(ks[0], (in_dim, 32), jnp.float32) * 0.1
    b1 = jax.random.normal(ks[1], (1, 32), jnp.float32) * 0.1
    w2 = jax.random.normal(ks[2], (32, 16), jnp.float32) * 0.1
    b2 = jax.random.normal(ks[3], (1, 16), jnp.float32) * 0.1
    w_mu = jax.random.normal(ks[4], (16, actor_shape), jnp.float32) * 0.1
    b_mu = jax.random.normal(ks[5], (1, actor_shape), jnp.float32) * 0.1
    w_sg = jax.random.normal(ks[6], (16, actor_shape), jnp.float32) * 0.1
    b_sg = jax.random.normal(ks[7], (1, actor_shape), jnp.float32) * 0.1
    w_c = jax.random.normal(ks[8], (16, critic_shape), jnp.float32) * 0.1
    b_c = jax.random.normal(ks[9], (1, critic_shape), jnp.float32) * 0.1
    return w1, b1, w2, b2, w_mu, b_mu, w_sg, b_sg, w_c, b_c


if __name__ == "__main__":
    key = jax.random.PRNGKey(0)
    kx, kp = jax.random.split(key)

    # Small but grid-exercising shapes: batch=256 (2 tiles of 128 after clamping),
    # obs dim=8, actor_shape=2, critic_shape=1.
    batch, in_dim, actor_shape, critic_shape = 256, 8, 2, 1
    x = jax.random.normal(kx, (batch, in_dim), jnp.float32)
    params = init_params(kp, in_dim, actor_shape, critic_shape)

    # One-time parameter packing (hoisted out of the per-call forward path).
    packed = pack_actor_critic_params(*params)

    # TODO(synk): x.requires_grad_() in the torch forward is autograd bookkeeping with
    # no inference-time equivalent; forward math is fully implemented.
    mu, sigma, value = actor_critic_forward(x, packed)
    mu, sigma, value = jax.block_until_ready((mu, sigma, value))

    mu_ref, sigma_ref, value_ref = actor_critic_ref(x, *params)

    assert mu.shape == (batch, actor_shape), mu.shape
    assert sigma.shape == (batch, actor_shape), sigma.shape
    assert value.shape == (batch, critic_shape), value.shape
    assert jnp.allclose(mu, mu_ref, atol=1e-3, rtol=1e-3)
    assert jnp.allclose(sigma, sigma_ref, atol=1e-3, rtol=1e-3)
    assert jnp.allclose(value, value_ref, atol=1e-3, rtol=1e-3)

    print("KERNEL_OK")
</pallas_src>

<mosaic_0001>
module attributes {stable_mosaic.version = 11 : i64} {
  func.func @actor_critic_kernel(%arg0: i32, %arg1: memref<128x8xf32, #tpu.memory_space<vmem>>, %arg2: memref<8x32xbf16, #tpu.memory_space<vmem>>, %arg3: memref<1x32xf32, #tpu.memory_space<vmem>>, %arg4: memref<32x16xbf16, #tpu.memory_space<vmem>>, %arg5: memref<1x16xf32, #tpu.memory_space<vmem>>, %arg6: memref<16x8xbf16, #tpu.memory_space<vmem>>, %arg7: memref<1x8xf32, #tpu.memory_space<vmem>>, %arg8: memref<128x8xf32, #tpu.memory_space<vmem>>) attributes {dimension_semantics = [#tpu.dimension_semantics<parallel>], iteration_bounds = array<i64: 2>, scalar_prefetch = 0 : i64, scratch_operands = 0 : i64, tpu.core_type = #tpu.core_type<tc>, window_params = [{transform_indices = @transform_0, window_bounds = array<i64: 128, 8>}, {pipeline_mode = #tpu.pipeline_mode<synchronous>, transform_indices = @transform_1, window_bounds = array<i64: 8, 32>}, {pipeline_mode = #tpu.pipeline_mode<synchronous>, transform_indices = @transform_2, window_bounds = array<i64: 1, 32>}, {pipeline_mode = #tpu.pipeline_mode<synchronous>, transform_indices = @transform_3, window_bounds = array<i64: 32, 16>}, {pipeline_mode = #tpu.pipeline_mode<synchronous>, transform_indices = @transform_4, window_bounds = array<i64: 1, 16>}, {pipeline_mode = #tpu.pipeline_mode<synchronous>, transform_indices = @transform_5, window_bounds = array<i64: 16, 8>}, {pipeline_mode = #tpu.pipeline_mode<synchronous>, transform_indices = @transform_6, window_bounds = array<i64: 1, 8>}, {transform_indices = @transform_7, window_bounds = array<i64: 128, 8>}]} {
    %c0 = arith.constant 0 : index
    %c0_0 = arith.constant 0 : index
    %0 = vector.load %arg1[%c0, %c0_0] : memref<128x8xf32, #tpu.memory_space<vmem>>, vector<128x8xf32>
    %1 = arith.truncf %0 : vector<128x8xf32> to vector<128x8xbf16>
    %c0_1 = arith.constant 0 : index
    %c0_2 = arith.constant 0 : index
    %2 = vector.load %arg2[%c0_1, %c0_2] : memref<8x32xbf16, #tpu.memory_space<vmem>>, vector<8x32xbf16>
    %cst = arith.constant dense<0.000000e+00> : vector<128x32xf32>
    %3 = tpu.matmul %1, %2, %cst {dimension_numbers = #tpu.dot_dimension_numbers<[1], [0], [0], [1], [0, 0, 1, 1], [], []>} : vector<128x8xbf16>, vector<8x32xbf16>, vector<128x32xf32> -> vector<128x32xf32>
    %c0_3 = arith.constant 0 : index
    %c0_4 = arith.constant 0 : index
    %4 = vector.load %arg3[%c0_3, %c0_4] : memref<1x32xf32, #tpu.memory_space<vmem>>, vector<1x32xf32>
    %5 = vector.broadcast %4 : vector<1x32xf32> to vector<128x32xf32>
    %6 = arith.addf %3, %5 : vector<128x32xf32>
    %cst_5 = arith.constant 0.000000e+00 : f32
    %7 = vector.broadcast %cst_5 : f32 to vector<128x32xf32>
    %8 = arith.maximumf %6, %7 : vector<128x32xf32>
    %9 = arith.truncf %8 : vector<128x32xf32> to vector<128x32xbf16>
    %c0_6 = arith.constant 0 : index
    %c0_7 = arith.constant 0 : index
    %10 = vector.load %arg4[%c0_6, %c0_7] : memref<32x16xbf16, #tpu.memory_space<vmem>>, vector<32x16xbf16>
    %cst_8 = arith.constant dense<0.000000e+00> : vector<128x16xf32>
    %11 = tpu.matmul %9, %10, %cst_8 {dimension_numbers = #tpu.dot_dimension_numbers<[1], [0], [0], [1], [0, 0, 1, 1], [], []>} : vector<128x32xbf16>, vector<32x16xbf16>, vector<128x16xf32> -> vector<128x16xf32>
    %c0_9 = arith.constant 0 : index
    %c0_10 = arith.constant 0 : index
    %12 = vector.load %arg5[%c0_9, %c0_10] : memref<1x16xf32, #tpu.memory_space<vmem>>, vector<1x16xf32>
    %13 = vector.broadcast %12 : vector<1x16xf32> to vector<128x16xf32>
    %14 = arith.addf %11, %13 : vector<128x16xf32>
    %cst_11 = arith.constant 0.000000e+00 : f32
    %15 = vector.broadcast %cst_11 : f32 to vector<128x16xf32>
    %16 = arith.maximumf %14, %15 : vector<128x16xf32>
    %17 = arith.truncf %16 : vector<128x16xf32> to vector<128x16xbf16>
    %c0_12 = arith.constant 0 : index
    %c0_13 = arith.constant 0 : index
    %18 = vector.load %arg6[%c0_12, %c0_13] : memref<16x8xbf16, #tpu.memory_space<vmem>>, vector<16x8xbf16>
    %cst_14 = arith.constant dense<0.000000e+00> : vector<128x8xf32>
    %19 = tpu.matmul %17, %18, %cst_14 {dimension_numbers = #tpu.dot_dimension_numbers<[1], [0], [0], [1], [0, 0, 1, 1], [], []>} : vector<128x16xbf16>, vector<16x8xbf16>, vector<128x8xf32> -> vector<128x8xf32>
    %c0_15 = arith.constant 0 : index
    %c0_16 = arith.constant 0 : index
    %20 = vector.load %arg7[%c0_15, %c0_16] : memref<1x8xf32, #tpu.memory_space<vmem>>, vector<1x8xf32>
    %21 = vector.broadcast %20 : vector<1x8xf32> to vector<128x8xf32>
    %22 = arith.addf %19, %21 : vector<128x8xf32>
    %c0_17 = arith.constant 0 : index
    %c0_18 = arith.constant 0 : index
    %23 = vector.load %arg8[%c0_17, %c0_18] : memref<128x8xf32, #tpu.memory_space<vmem>>, vector<128x8xf32>
    tpu.vector_store %arg8[%c0_17, %c0_18], %22 {strides = array<i32>} : memref<128x8xf32, #tpu.memory_space<vmem>>, vector<128x8xf32>,
    return
  }
  func.func @transform_0(%arg0: i32) -> (i32, i32) {
    %c0_i32 = arith.constant 0 : i32
    %c0_i32_0 = arith.constant 0 : i32
    return %arg0, %c0_i32 : i32, i32
  }
  func.func @transform_1(%arg0: i32) -> (i32, i32) {
    %c0_i32 = arith.constant 0 : i32
    %c0_i32_0 = arith.constant 0 : i32
    %c0_i32_1 = arith.constant 0 : i32
    return %c0_i32, %c0_i32_0 : i32, i32
  }
  func.func @transform_2(%arg0: i32) -> (i32, i32) {
    %c0_i32 = arith.constant 0 : i32
    %c0_i32_0 = arith.constant 0 : i32
    %c0_i32_1 = arith.constant 0 : i32
    return %c0_i32, %c0_i32_0 : i32, i32
  }
  func.func @transform_3(%arg0: i32) -> (i32, i32) {
    %c0_i32 = arith.constant 0 : i32
    %c0_i32_0 = arith.constant 0 : i32
    %c0_i32_1 = arith.constant 0 : i32
    return %c0_i32, %c0_i32_0 : i32, i32
  }
  func.func @transform_4(%arg0: i32) -> (i32, i32) {
    %c0_i32 = arith.constant 0 : i32
    %c0_i32_0 = arith.constant 0 : i32
    %c0_i32_1 = arith.constant 0 : i32
    return %c0_i32, %c0_i32_0 : i32, i32
  }
  func.func @transform_5(%arg0: i32) -> (i32, i32) {
    %c0_i32 = arith.constant 0 : i32
    %c0_i32_0 = arith.constant 0 : i32
    %c0_i32_1 = arith.constant 0 : i32
    return %c0_i32, %c0_i32_0 : i32, i32
  }
  func.func @transform_6(%arg0: i32) -> (i32, i32) {
    %c0_i32 = arith.constant 0 : i32
    %c0_i32_0 = arith.constant 0 : i32
    %c0_i32_1 = arith.constant 0 : i32
    return %c0_i32, %c0_i32_0 : i32, i32
  }
  func.func @transform_7(%arg0: i32) -> (i32, i32) {
    %c0_i32 = arith.constant 0 : i32
    %c0_i32_0 = arith.constant 0 : i32
    return %arg0, %c0_i32 : i32, i32
  }
}

</mosaic_0001>

<llo_original>
// kernel: tpu_custom_call.1
$region0: #{tpu_custom_call.1}
  #allocation0 [shape = 'u32[]', space=smem, size = 0x4, offset = 0x4, fixed_abs, tag = 'smem constant byte address 0x4 - core index']
  #allocation1 [shape = 'u32[144,128]{1,0:T(1,128)}', space=vmem, size = 0x12000, scoped, tag = 'internal scratch']
  %s0 = inlined_call_operand.vmem [shape: f32[256,8], index: 0, kind: input, shape index: {}]
  %s1 = inlined_call_operand.vmem [shape: bf16[8,32], index: 1, kind: input, shape index: {}]
  %s2 = inlined_call_operand.vmem [shape: f32[1,32], index: 2, kind: input, shape index: {}]
  %s3 = inlined_call_operand.vmem [shape: bf16[32,16], index: 3, kind: input, shape index: {}]
  %s4 = inlined_call_operand.vmem [shape: f32[1,16], index: 4, kind: input, shape index: {}]
  %s5 = inlined_call_operand.vmem [shape: bf16[16,8], index: 5, kind: input, shape index: {}]
  %s6 = inlined_call_operand.vmem [shape: f32[1,8], index: 6, kind: input, shape index: {}]
  %s7 = inlined_call_operand.vmem [shape: f32[256,8], index: 7, kind: output, shape index: {}]
  %s8 = sld [smem:[#allocation0]]
  $region61: #{tpu_custom_call.1} parent=0
    _
  %s10 = ssub.s32 1, %s8
  %s11 = scalar_select 0, %s10, %s8
  loop: start=0, step=1, limit=4
  $region2: #{tpu_custom_call.1} parent=0 // loop_pre_header
    _
  $region3: #{tpu_custom_call.1} parent=0 // loop_header
    %s13 = sphi 0, %s17
    %p14 = scmp.ge.s32.totalorder %s13, 4
    %s23 = sphi 0, %s25
    %s26 = sphi 0, %s23
    %s27 = sphi 0, %s26
    %s43 = sphi 0, %s27
    %s47 = sphi 0, %s47
    %s49 = sphi 0, %s47
    %s50 = sphi 0, %s49
    %s64 = sphi 0, %s50
    %s68 = sphi 0, %s68
    %s70 = sphi 0, %s68
    %s71 = sphi 0, %s70
    %s85 = sphi 0, %s71
    %s89 = sphi 0, %s89
    %s91 = sphi 0, %s89
    %s92 = sphi 0, %s91
    %s106 = sphi 0, %s92
    %s110 = sphi 0, %s110
    %s112 = sphi 0, %s110
    %s113 = sphi 0, %s112
    %s127 = sphi 0, %s113
    %s131 = sphi 0, %s131
    %s133 = sphi 0, %s131
    %s134 = sphi 0, %s133
    %s148 = sphi 0, %s134
    %s152 = sphi 0, %s152
    %s154 = sphi 0, %s152
    %s155 = sphi 0, %s154
    %s169 = sphi 0, %s155
    %s175 = sphi 0, %s177
    %s178 = sphi 0, %s175
    %s179 = sphi 0, %s178
    %s195 = sphi 0, %s179
  $region4: #{tpu_custom_call.1} parent=0 // loop_header_branch
    %16 = sbr.rel (%p14) target = $region8
  $region5: #{tpu_custom_call.1} parent=0 // loop_body
    %s18 = ssub.s32 %s13, 1
    %s19 = ssub.s32 %s13, 2
    %s20 = sadd.s32 %s13, 1
    %s21 = ssub.s32 %s13, %s20
    %p22 = scmp.eq.s32.totalorder %s21, 0
    %s24 = sadd.s32 %s23, 1
    %s25 = scalar_select %p22, %s23, %s24
    %p28 = pneg %p22
    %p29 = scmp.eq.s32.totalorder %s13, 1
    %p30 = por %p28, %p29
    %p31 = scmp.ne.s32.totalorder %s23, %s26
    %p32 = scmp.eq.s32.totalorder %s13, 0
    %p33 = por %p31, %p32
    %p34 = scmp.ne.s32.totalorder %s23, %s26
    %p35 = scmp.eq.s32.totalorder %s18, 1
    %p36 = por %p34, %p35
    %p37 = scmp.ne.s32.totalorder %s26, %s27
    %p38 = scmp.eq.s32.totalorder %s18, 0
    %p39 = por %p37, %p38
    %p40 = scmp.ne.s32.totalorder %s26, %s27
    %p41 = scmp.eq.s32.totalorder %s19, 1
    %p42 = por %p40, %p41
    %p44 = scmp.ne.s32.totalorder %s27, %s43
    %p45 = scmp.eq.s32.totalorder %s19, 0
    %p46 = por %p44, %p45
    %s48 = sadd.s32 %s47, 1
    %p51 = scmp.eq.s32.totalorder %s13, 1
    %p52 = scmp.ne.s32.totalorder %s47, %s49
    %p53 = scmp.eq.s32.totalorder %s13, 0
    %p54 = por %p52, %p53
    %p55 = scmp.ne.s32.totalorder %s47, %s49
    %p56 = scmp.eq.s32.totalorder %s18, 1
    %p57 = por %p55, %p56
    %p58 = scmp.ne.s32.totalorder %s49, %s50
    %p59 = scmp.eq.s32.totalorder %s18, 0
    %p60 = por %p58, %p59
    %p61 = scmp.ne.s32.totalorder %s49, %s50
    %p62 = scmp.eq.s32.totalorder %s19, 1
    %p63 = por %p61, %p62
    %p65 = scmp.ne.s32.totalorder %s50, %s64
    %p66 = scmp.eq.s32.totalorder %s19, 0
    %p67 = por %p65, %p66
    %s69 = sadd.s32 %s68, 1
    %p72 = scmp.eq.s32.totalorder %s13, 1
    %p73 = scmp.ne.s32.totalorder %s68, %s70
    %p74 = scmp.eq.s32.totalorder %s13, 0
    %p75 = por %p73, %p74
    %p76 = scmp.ne.s32.totalorder %s68, %s70
    %p77 = scmp.eq.s32.totalorder %s18, 1
    %p78 = por %p76, %p77
    %p79 = scmp.ne.s32.totalorder %s70, %s71
    %p80 = scmp.eq.s32.totalorder %s18, 0
    %p81 = por %p79, %p80
    %p82 = scmp.ne.s32.totalorder %s70, %s71
    %p83 = scmp.eq.s32.totalorder %s19, 1
    %p84 = por %p82, %p83
    %p86 = scmp.ne.s32.totalorder %s71, %s85
    %p87 = scmp.eq.s32.totalorder %s19, 0
    %p88 = por %p86, %p87
    %s90 = sadd.s32 %s89, 1
    %p93 = scmp.eq.s32.totalorder %s13, 1
    %p94 = scmp.ne.s32.totalorder %s89, %s91
    %p95 = scmp.eq.s32.totalorder %s13, 0
    %p96 = por %p94, %p95
    %p97 = scmp.ne.s32.totalorder %s89, %s91
    %p98 = scmp.eq.s32.totalorder %s18, 1
    %p99 = por %p97, %p98
    %p100 = scmp.ne.s32.totalorder %s91, %s92
    %p101 = scmp.eq.s32.totalorder %s18, 0
    %p102 = por %p100, %p101
    %p103 = scmp.ne.s32.totalorder %s91, %s92
    %p104 = scmp.eq.s32.totalorder %s19, 1
    %p105 = por %p103, %p104
    %p107 = scmp.ne.s32.totalorder %s92, %s106
    %p108 = scmp.eq.s32.totalorder %s19, 0
    %p109 = por %p107, %p108
    %s111 = sadd.s32 %s110, 1
    %p114 = scmp.eq.s32.totalorder %s13, 1
    %p115 = scmp.ne.s32.totalorder %s110, %s112
    %p116 = scmp.eq.s32.totalorder %s13, 0
    %p117 = por %p115, %p116
    %p118 = scmp.ne.s32.totalorder %s110, %s112
    %p119 = scmp.eq.s32.totalorder %s18, 1
    %p120 = por %p118, %p119
    %p121 = scmp.ne.s32.totalorder %s112, %s113
    %p122 = scmp.eq.s32.totalorder %s18, 0
    %p123 = por %p121, %p122
    %p124 = scmp.ne.s32.totalorder %s112, %s113
    %p125 = scmp.eq.s32.totalorder %s19, 1
    %p126 = por %p124, %p125
    %p128 = scmp.ne.s32.totalorder %s113, %s127
    %p129 = scmp.eq.s32.totalorder %s19, 0
    %p130 = por %p128, %p129
    %s132 = sadd.s32 %s131, 1
    %p135 = scmp.eq.s32.totalorder %s13, 1
    %p136 = scmp.ne.s32.totalorder %s131, %s133
    %p137 = scmp.eq.s32.totalorder %s13, 0
    %p138 = por %p136, %p137
    %p139 = scmp.ne.s32.totalorder %s131, %s133
    %p140 = scmp.eq.s32.totalorder %s18, 1
    %p141 = por %p139, %p140
    %p142 = scmp.ne.s32.totalorder %s133, %s134
    %p143 = scmp.eq.s32.totalorder %s18, 0
    %p144 = por %p142, %p143
    %p145 = scmp.ne.s32.totalorder %s133, %s134
    %p146 = scmp.eq.s32.totalorder %s19, 1
    %p147 = por %p145, %p146
    %p149 = scmp.ne.s32.totalorder %s134, %s148
    %p150 = scmp.eq.s32.totalorder %s19, 0
    %p151 = por %p149, %p150
    %s153 = sadd.s32 %s152, 1
    %p156 = scmp.eq.s32.totalorder %s13, 1
    %p157 = scmp.ne.s32.totalorder %s152, %s154
    %p158 = scmp.eq.s32.totalorder %s13, 0
    %p159 = por %p157, %p158
    %p160 = scmp.ne.s32.totalorder %s152, %s154
    %p161 = scmp.eq.s32.totalorder %s18, 1
    %p162 = por %p160, %p161
    %p163 = scmp.ne.s32.totalorder %s154, %s155
    %p164 = scmp.eq.s32.totalorder %s18, 0
    %p165 = por %p163, %p164
    %p166 = scmp.ne.s32.totalorder %s154, %s155
    %p167 = scmp.eq.s32.totalorder %s19, 1
    %p168 = por %p166, %p167
    %p170 = scmp.ne.s32.totalorder %s155, %s169
    %p171 = scmp.eq.s32.totalorder %s19, 0
    %p172 = por %p170, %p171
    %s173 = ssub.s32 %s13, %s20
    %p174 = scmp.eq.s32.totalorder %s173, 0
    %s176 = sadd.s32 %s175, 1
    %s177 = scalar_select %p174, %s175, %s176
    %p180 = pneg %p174
    %p181 = scmp.eq.s32.totalorder %s13, 1
    %p182 = por %p180, %p181
    %p183 = scmp.ne.s32.totalorder %s175, %s178
    %p184 = scmp.eq.s32.totalorder %s13, 0
    %p185 = por %p183, %p184
    %p186 = scmp.ne.s32.totalorder %s175, %s178
    %p187 = scmp.eq.s32.totalorder %s18, 1
    %p188 = por %p186, %p187
    %p189 = scmp.ne.s32.totalorder %s178, %s179
    %p190 = scmp.eq.s32.totalorder %s18, 0
    %p191 = por %p189, %p190
    %p192 = scmp.ne.s32.totalorder %s178, %s179
    %p193 = scmp.eq.s32.totalorder %s19, 1
    %p194 = por %p192, %p193
    %p196 = scmp.ne.s32.totalorder %s179, %s195
    %p197 = scmp.eq.s32.totalorder %s19, 0
    %p198 = por %p196, %p197
    %p199 = scmp.le.s32.totalorder 1, %s13
    %p200 = scmp.lt.s32.totalorder %s13, 3
    %p201 = pnand %p199, %p200
    %p202 = pneg %p201
    // Predicated region
    $region9: #{tpu_custom_call.1} parent=5 // pred_check
      _
    $region10: #{tpu_custom_call.1} parent=5 // pred_check_branch
      %204 = sbr.rel (%p201) target = $region12
    $region11: #{tpu_custom_call.1} parent=5 // pred_region
      %s205 = ssub.s32 %s13, 1
      // Predicated region
      $region13: #{tpu_custom_call.1} parent=11 // pred_check
        %p206 = pneg %p60
      $region14: #{tpu_custom_call.1} parent=11 // pred_check_branch
        %208 = sbr.rel (%p206) target = $region16
      $region15: #{tpu_custom_call.1} parent=11 // pred_region
        _
      $region16: #{tpu_custom_call.1} parent=11 // pred_fallthru
        _
      // Predicated region
      $region17: #{tpu_custom_call.1} parent=11 // pred_check
        %p209 = pneg %p81
      $region18: #{tpu_custom_call.1} parent=11 // pred_check_branch
        %211 = sbr.rel (%p209) target = $region20
      $region19: #{tpu_custom_call.1} parent=11 // pred_region
        _
      $region20: #{tpu_custom_call.1} parent=11 // pred_fallthru
        _
      // Predicated region
      $region21: #{tpu_custom_call.1} parent=11 // pred_check
        %p212 = pneg %p102
      $region22: #{tpu_custom_call.1} parent=11 // pred_check_branch
        %214 = sbr.rel (%p212) target = $region24
      $region23: #{tpu_custom_call.1} parent=11 // pred_region
        _
      $region24: #{tpu_custom_call.1} parent=11 // pred_fallthru
        _
      // Predicated region
      $region25: #{tpu_custom_call.1} parent=11 // pred_check
        %p215 = pneg %p123
      $region26: #{tpu_custom_call.1} parent=11 // pred_check_branch
        %217 = sbr.rel (%p215) target = $region28
      $region27: #{tpu_custom_call.1} parent=11 // pred_region
        _
      $region28: #{tpu_custom_call.1} parent=11 // pred_fallthru
        _
      // Predicated region
      $region29: #{tpu_custom_call.1} parent=11 // pred_check
        %p218 = pneg %p144
      $region30: #{tpu_custom_call.1} parent=11 // pred_check_branch
        %220 = sbr.rel (%p218) target = $region32
      $region31: #{tpu_custom_call.1} parent=11 // pred_region
        _
      $region32: #{tpu_custom_call.1} parent=11 // pred_fallthru
        _
      // Predicated region
      $region33: #{tpu_custom_call.1} parent=11 // pred_check
        %p221 = pneg %p165
      $region34: #{tpu_custom_call.1} parent=11 // pred_check_branch
        %223 = sbr.rel (%p221) target = $region36
      $region35: #{tpu_custom_call.1} parent=11 // pred_region
        _
      $region36: #{tpu_custom_call.1} parent=11 // pred_fallthru
        _
    $region12: #{tpu_custom_call.1} parent=5 // pred_fallthru
      _
    %p224 = scmp.lt.s32.totalorder %s13, 2
    // Predicated region
    $region37: #{tpu_custom_call.1} parent=5 // pred_check
      %p225 = pneg %p224
    $region38: #{tpu_custom_call.1} parent=5 // pred_check_branch
      %227 = sbr.rel (%p225) target = $region40
    $region39: #{tpu_custom_call.1} parent=5 // pred_region
      // Predicated region
      $region41: #{tpu_custom_call.1} parent=39 // pred_check
        %p228 = pneg %p33
      $region42: #{tpu_custom_call.1} parent=39 // pred_check_branch
        %230 = sbr.rel (%p228) target = $region44
      $region43: #{tpu_custom_call.1} parent=39 // pred_region
        %s231 = smul.u32 16, %s13
        %p232 = scmp.lt.s32.totalorder %s231, 31
        %s233 = scalar_select %p232, %s231, 31
        %s234 = smul.addr %s233, 8
        %s235 = scalar_lea.vmem %s0, %s234
        %s236 = smul.u32 16, %s13
      $region44: #{tpu_custom_call.1} parent=39 // pred_fallthru
        _
    $region40: #{tpu_custom_call.1} parent=5 // pred_fallthru
      _
    %p237 = scmp.le.s32.totalorder 1, %s13
    %p238 = scmp.lt.s32.totalorder %s13, 3
    %p239 = pnand %p237, %p238
    %p240 = pneg %p239
    // Predicated region
    $region45: #{tpu_custom_call.1} parent=5 // pred_check
      _
    $region46: #{tpu_custom_call.1} parent=5 // pred_check_branch
      %242 = sbr.rel (%p239) target = $region48
    $region47: #{tpu_custom_call.1} parent=5 // pred_region
      %s243 = ssub.s32 %s13, 1
      %s244 = smul.u32 16, %s18
      %p245 = scmp.lt.s32.totalorder %s244, 31
      %s246 = scalar_select %p245, %s244, 31
      %s247 = smul.addr %s246, 8
      %s248 = scalar_lea.vmem %s0, %s247
      %p249 = pneg %p39
      %p250 = pneg %p36
      %p251 = pneg %p60
      %p252 = pneg %p57
      %p253 = pneg %p81
      %p254 = pneg %p78
      %p255 = pneg %p102
      %p256 = pneg %p99
      %p257 = pneg %p123
      %p258 = pneg %p120
      %p259 = pneg %p144
      %p260 = pneg %p141
      %p261 = pneg %p165
      %p262 = pneg %p162
      %p263 = pneg %p191
      %p264 = pneg %p188
      %s265 = smul.u32 16, %s18
      %p266 = scmp.lt.s32.totalorder %s265, 31
      %s267 = scalar_select %p266, %s265, 31
      %s268 = smul.addr %s267, 8
      %s269 = scalar_lea.vmem %s7, %s268
      %s270 = smul.u32 16, %s18
      %p271 = scmp.lt.s32.totalorder %s270, 31
      %s272 = scalar_select %p271, %s270, 31
      %s273 = smul.addr %s272, 8
      %s274 = scalar_lea.vmem %s0, %s273
      %s275 = smul.u32 16, %s18
      %s276 = smul.u32 16, %s18
      %p277 = scmp.lt.s32.totalorder %s276, 31
      %s278 = scalar_select %p277, %s276, 31
      %s279 = smul.addr %s278, 8
      %s280 = scalar_lea.vmem %s7, %s279
      %s281 = smul.u32 16, %s18
      %v283 = vld [vmem:[%s274] sm:$0xff]
      %v284 = vld [vmem:[%s274 + $0x8] sm:$0xff]
      %v285 = vld [vmem:[%s274 + $0x10] sm:$0xff]
      %v286 = vld [vmem:[%s274 + $0x18] sm:$0xff]
      %v287 = vld [vmem:[%s274 + $0x20] sm:$0xff]
      %v288 = vld [vmem:[%s274 + $0x28] sm:$0xff]
      %v289 = vld [vmem:[%s274 + $0x30] sm:$0xff]
      %v290 = vld [vmem:[%s274 + $0x38] sm:$0xff]
      %v291 = vld [vmem:[%s274 + $0x40] sm:$0xff]
      %v292 = vld [vmem:[%s274 + $0x48] sm:$0xff]
      %v293 = vld [vmem:[%s274 + $0x50] sm:$0xff]
      %v294 = vld [vmem:[%s274 + $0x58] sm:$0xff]
      %v295 = vld [vmem:[%s274 + $0x60] sm:$0xff]
      %v296 = vld [vmem:[%s274 + $0x68] sm:$0xff]
      %v297 = vld [vmem:[%s274 + $0x70] sm:$0xff]
      %v298 = vld [vmem:[%s274 + $0x78] sm:$0xff]
      %v299 = vpack.c.bf16 %v284, %v283
      %v300 = vpack.c.bf16 %v286, %v285
      %v301 = vpack.c.bf16 %v288, %v287
      %v302 = vpack.c.bf16 %v290, %v289
      %v303 = vpack.c.bf16 %v292, %v291
      %v304 = vpack.c.bf16 %v294, %v293
      %v305 = vpack.c.bf16 %v296, %v295
      %v306 = vpack.c.bf16 %v298, %v297
      %v307 = vld [vmem:[%s1] sm:$0xf]
      %v308 = vld [vmem:[%s2] sm:$0x1]
      %v310 = vlaneseq
      %v311 = vshrl.u32 %v310, 7
      %v312 = vsub.s32 0, %v311
      %v313 = vrot.slane %v308, %v312
      %vm315 = vcmask 64512
      %v317 = vsel %vm315, %v299, 0
      %v320 = vsel %vm315, %v300, 0
      %v323 = vsel %vm315, %v301, 0
      %v326 = vsel %vm315, %v302, 0
      %v329 = vsel %vm315, %v303, 0
      %v332 = vsel %vm315, %v304, 0
      %v335 = vsel %vm315, %v305, 0
      %v338 = vsel %vm315, %v306, 0
      %vm340 = vcmask 1043456
      %v342 = vsel %vm340, %v307, 0
      %344 = vmatprep.subr.bf16.mxu0 0
      %345 = vmatpush1.bf16.msra.mxu0 %v342
      %346 = vmatprep.subr.bf16.mxu0 0
      %347 = vmatpush1.bf16.msra.mxu0 0
      %348 = vmatprep.subr.bf16.mxu0 0
      %349 = vmatpush1.bf16.msra.mxu0 0
      %350 = vmatprep.subr.bf16.mxu0 0
      %351 = vmatpush1.bf16.msra.mxu0 0
      %352 = vmatprep.subr.bf16.mxu0 0
      %353 = vmatpush1.bf16.msra.mxu0 0
      %354 = vmatprep.subr.bf16.mxu0 0
      %355 = vmatpush1.bf16.msra.mxu0 0
      %356 = vmatprep.subr.bf16.mxu0 0
      %357 = vmatpush1.bf16.msra.mxu0 0
      %358 = vmatprep.subr.bf16.mxu0 0
      %359 = vmatpush1.bf16.msra.mxu0 0
      %360 = vmatprep.subr.bf16.mxu0 0
      %361 = vmatpush1.bf16.msra.mxu0 0
      %362 = vmatprep.subr.bf16.mxu0 0
      %363 = vmatpush1.bf16.msra.mxu0 0
      %364 = vmatprep.subr.bf16.mxu0 0
      %365 = vmatpush1.bf16.msra.mxu0 0
      %366 = vmatprep.subr.bf16.mxu0 0
      %367 = vmatpush1.bf16.msra.mxu0 0
      %368 = vmatprep.subr.bf16.mxu0 0
      %369 = vmatpush1.bf16.msra.mxu0 0
      %370 = vmatprep.subr.bf16.mxu0 0
      %371 = vmatpush1.bf16.msra.mxu0 0
      %372 = vmatprep.subr.bf16.mxu0 0
      %373 = vmatpush1.bf16.msra.mxu0 0
      %374 = vmatprep.subr.bf16.mxu0 0
      %375 = vmatpush1.bf16.msra.mxu0 0
      %376 = vmatprep.mubr.bf16.mxu0 0
      %377 = vmatmul.mubr.bf16.gmra.mrb[0].mxu0 %v317
      %v378 = vpop.f32.mrb[0].mxu0
      %v379 = vadd.f32 %v313, %v378
      %v380 = vpop.f32.mrb[0].mxu0
      %v381 = vpop.f32.mrb[0].mxu0
      %v382 = vadd.f32 %v313, %v381
      %v383 = vpop.f32.mrb[0].mxu0
      %384 = vmatprep.mubr.bf16.mxu0 0
      %385 = vmatmul.mubr.bf16.gmra.mrb[0].mxu0 %v320
      %v386 = vpop.f32.mrb[0].mxu0
      %v387 = vadd.f32 %v313, %v386
      %v388 = vpop.f32.mrb[0].mxu0
      %v389 = vpop.f32.mrb[0].mxu0
      %v390 = vadd.f32 %v313, %v389
      %v391 = vpop.f32.mrb[0].mxu0
      %392 = vmatprep.mubr.bf16.mxu0 0
      %393 = vmatmul.mubr.bf16.gmra.mrb[0].mxu0 %v323
      %v394 = vpop.f32.mrb[0].mxu0
      %v395 = vadd.f32 %v313, %v394
      %v396 = vpop.f32.mrb[0].mxu0
      %v397 = vpop.f32.mrb[0].mxu0
      %v398 = vadd.f32 %v313, %v397
      %v399 = vpop.f32.mrb[0].mxu0
      %400 = vmatprep.mubr.bf16.mxu0 0
      %401 = vmatmul.mubr.bf16.gmra.mrb[0].mxu0 %v326
      %v402 = vpop.f32.mrb[0].mxu0
      %v403 = vadd.f32 %v313, %v402
      %v404 = vpop.f32.mrb[0].mxu0
      %v405 = vpop.f32.mrb[0].mxu0
      %v406 = vadd.f32 %v313, %v405
      %v407 = vpop.f32.mrb[0].mxu0
      %408 = vmatprep.mubr.bf16.mxu0 0
      %409 = vmatmul.mubr.bf16.gmra.mrb[0].mxu0 %v329
      %v410 = vpop.f32.mrb[0].mxu0
      %v411 = vadd.f32 %v313, %v410
      %v412 = vpop.f32.mrb[0].mxu0
      %v413 = vpop.f32.mrb[0].mxu0
      %v414 = vadd.f32 %v313, %v413
      %v415 = vpop.f32.mrb[0].mxu0
      %416 = vmatprep.mubr.bf16.mxu0 0
      %417 = vmatmul.mubr.bf16.gmra.mrb[0].mxu0 %v332
      %v418 = vpop.f32.mrb[0].mxu0
      %v419 = vadd.f32 %v313, %v418
      %v420 = vpop.f32.mrb[0].mxu0
      %v421 = vpop.f32.mrb[0].mxu0
      %v422 = vadd.f32 %v313, %v421
      %v423 = vpop.f32.mrb[0].mxu0
      %424 = vmatprep.mubr.bf16.mxu0 0
      %425 = vmatmul.mubr.bf16.gmra.mrb[0].mxu0 %v335
      %v426 = vpop.f32.mrb[0].mxu0
      %v427 = vadd.f32 %v313, %v426
      %v428 = vpop.f32.mrb[0].mxu0
      %v429 = vpop.f32.mrb[0].mxu0
      %v430 = vadd.f32 %v313, %v429
      %v431 = vpop.f32.mrb[0].mxu0
      %432 = vmatprep.mubr.bf16.mxu0 0
      %433 = vmatmul.mubr.bf16.gmra.mrb[0].mxu0 %v338
      %v434 = vpop.f32.mrb[0].mxu0
      %v435 = vadd.f32 %v313, %v434
      %v436 = vpop.f32.mrb[0].mxu0
      %v437 = vpop.f32.mrb[0].mxu0
      %v438 = vadd.f32 %v313, %v437
      %v439 = vpop.f32.mrb[0].mxu0
      %440 = vdwg.mxu0
      %v441 = vmax.f32 %v379, 0.0
      %v442 = vmax.f32 %v382, 0.0
      %v443 = vmax.f32 %v387, 0.0
      %v444 = vmax.f32 %v390, 0.0
      %v445 = vmax.f32 %v395, 0.0
      %v446 = vmax.f32 %v398, 0.0
      %v447 = vmax.f32 %v403, 0.0
      %v448 = vmax.f32 %v406, 0.0
      %v449 = vmax.f32 %v411, 0.0
      %v450 = vmax.f32 %v414, 0.0
      %v451 = vmax.f32 %v419, 0.0
      %v452 = vmax.f32 %v422, 0.0
      %v453 = vmax.f32 %v427, 0.0
      %v454 = vmax.f32 %v430, 0.0
      %v455 = vmax.f32 %v435, 0.0
      %v456 = vmax.f32 %v438, 0.0
      %v457 = vpack.c.bf16 %v442, %v441
      %v458 = vpack.c.bf16 %v444, %v443
      %v459 = vpack.c.bf16 %v446, %v445
      %v460 = vpack.c.bf16 %v448, %v447
      %v461 = vpack.c.bf16 %v450, %v449
      %v462 = vpack.c.bf16 %v452, %v451
      %v463 = vpack.c.bf16 %v454, %v453
      %v464 = vpack.c.bf16 %v456, %v455
      %v465 = vld [vmem:[%s3] sm:$0xf]
      %v466 = vld [vmem:[%s3 + $0x4] sm:$0xf]
      %v467 = vld [vmem:[%s3 + $0x8] sm:$0xf]
      %v468 = vld [vmem:[%s3 + $0xc] sm:$0xf]
      %v469 = vld [vmem:[%s4] sm:$0x1]
      %v471 = vlaneseq
      %v472 = vshrl.u32 %v471, 7
      %v473 = vsub.s32 0, %v472
      %v474 = vrot.slane %v469, %v473
      %v480 = vunpack.c.l.b16 %v465
      %v481 = vunpack.c.l.b16 %v466
      %v482 = vunpack.c.l.b16 %v467
      %v483 = vunpack.c.l.b16 %v468
      %v484 = vpack.c.b16 %v481, %v480
      %v485 = vpack.c.b16 %v483, %v482
      %vm488 = vcmask 261120
      %v490 = vsel %vm488, %v457, 0
      %v493 = vsel %vm488, %v458, 0
      %v496 = vsel %vm488, %v459, 0
      %v499 = vsel %vm488, %v460, 0
      %v502 = vsel %vm488, %v461, 0
      %v505 = vsel %vm488, %v462, 0
      %v508 = vsel %vm488, %v463, 0
      %v511 = vsel %vm488, %v464, 0
      %513 = vmatprep.subr.bf16.mxu0 0
      %514 = vmatpush1.bf16.msra.mxu0 %v484
      %515 = vmatprep.subr.bf16.mxu0 0
      %516 = vmatpush1.bf16.msra.mxu0 %v485
      %517 = vmatprep.subr.bf16.mxu0 0
      %518 = vmatpush1.bf16.msra.mxu0 0
      %519 = vmatprep.subr.bf16.mxu0 0
      %520 = vmatpush1.bf16.msra.mxu0 0
      %521 = vmatprep.subr.bf16.mxu0 0
      %522 = vmatpush1.bf16.msra.mxu0 0
      %523 = vmatprep.subr.bf16.mxu0 0
      %524 = vmatpush1.bf16.msra.mxu0 0
      %525 = vmatprep.subr.bf16.mxu0 0
      %526 = vmatpush1.bf16.msra.mxu0 0
      %527 = vmatprep.subr.bf16.mxu0 0
      %528 = vmatpush1.bf16.msra.mxu0 0
      %529 = vmatprep.subr.bf16.mxu0 0
      %530 = vmatpush1.bf16.msra.mxu0 0
      %531 = vmatprep.subr.bf16.mxu0 0
      %532 = vmatpush1.bf16.msra.mxu0 0
      %533 = vmatprep.subr.bf16.mxu0 0
      %534 = vmatpush1.bf16.msra.mxu0 0
      %535 = vmatprep.subr.bf16.mxu0 0
      %536 = vmatpush1.bf16.msra.mxu0 0
      %537 = vmatprep.subr.bf16.mxu0 0
      %538 = vmatpush1.bf16.msra.mxu0 0
      %539 = vmatprep.subr.bf16.mxu0 0
      %540 = vmatpush1.bf16.msra.mxu0 0
      %541 = vmatprep.subr.bf16.mxu0 0
      %542 = vmatpush1.bf16.msra.mxu0 0
      %543 = vmatprep.subr.bf16.mxu0 0
      %544 = vmatpush1.bf16.msra.mxu0 0
      %545 = vmatprep.mubr.bf16.mxu0 0
      %546 = vmatmul.mubr.bf16.gmra.mrb[0].mxu0 %v490
      %v547 = vpop.f32.mrb[0].mxu0
      %v548 = vadd.f32 %v474, %v547
      %v549 = vpop.f32.mrb[0].mxu0
      %v550 = vpop.f32.mrb[0].mxu0
      %v551 = vadd.f32 %v474, %v550
      %v552 = vpop.f32.mrb[0].mxu0
      %553 = vmatprep.mubr.bf16.mxu0 0
      %554 = vmatmul.mubr.bf16.gmra.mrb[0].mxu0 %v493
      %v555 = vpop.f32.mrb[0].mxu0
      %v556 = vadd.f32 %v474, %v555
      %v557 = vpop.f32.mrb[0].mxu0
      %v558 = vpop.f32.mrb[0].mxu0
      %v559 = vadd.f32 %v474, %v558
      %v560 = vpop.f32.mrb[0].mxu0
      %561 = vmatprep.mubr.bf16.mxu0 0
      %562 = vmatmul.mubr.bf16.gmra.mrb[0].mxu0 %v496
      %v563 = vpop.f32.mrb[0].mxu0
      %v564 = vadd.f32 %v474, %v563
      %v565 = vpop.f32.mrb[0].mxu0
      %v566 = vpop.f32.mrb[0].mxu0
      %v567 = vadd.f32 %v474, %v566
      %v568 = vpop.f32.mrb[0].mxu0
      %569 = vmatprep.mubr.bf16.mxu0 0
      %570 = vmatmul.mubr.bf16.gmra.mrb[0].mxu0 %v499
      %v571 = vpop.f32.mrb[0].mxu0
      %v572 = vadd.f32 %v474, %v571
      %v573 = vpop.f32.mrb[0].mxu0
      %v574 = vpop.f32.mrb[0].mxu0
      %v575 = vadd.f32 %v474, %v574
      %v576 = vpop.f32.mrb[0].mxu0
      %577 = vmatprep.mubr.bf16.mxu0 0
      %578 = vmatmul.mubr.bf16.gmra.mrb[0].mxu0 %v502
      %v579 = vpop.f32.mrb[0].mxu0
      %v580 = vadd.f32 %v474, %v579
      %v581 = vpop.f32.mrb[0].mxu0
      %v582 = vpop.f32.mrb[0].mxu0
      %v583 = vadd.f32 %v474, %v582
      %v584 = vpop.f32.mrb[0].mxu0
      %585 = vmatprep.mubr.bf16.mxu0 0
      %586 = vmatmul.mubr.bf16.gmra.mrb[0].mxu0 %v505
      %v587 = vpop.f32.mrb[0].mxu0
      %v588 = vadd.f32 %v474, %v587
      %v589 = vpop.f32.mrb[0].mxu0
      %v590 = vpop.f32.mrb[0].mxu0
      %v591 = vadd.f32 %v474, %v590
      %v592 = vpop.f32.mrb[0].mxu0
      %593 = vmatprep.mubr.bf16.mxu0 0
      %594 = vmatmul.mubr.bf16.gmra.mrb[0].mxu0 %v508
      %v595 = vpop.f32.mrb[0].mxu0
      %v596 = vadd.f32 %v474, %v595
      %v597 = vpop.f32.mrb[0].mxu0
      %v598 = vpop.f32.mrb[0].mxu0
      %v599 = vadd.f32 %v474, %v598
      %v600 = vpop.f32.mrb[0].mxu0
      %601 = vmatprep.mubr.bf16.mxu0 0
      %602 = vmatmul.mubr.bf16.gmra.mrb[0].mxu0 %v511
      %v603 = vpop.f32.mrb[0].mxu0
      %v604 = vadd.f32 %v474, %v603
      %v605 = vpop.f32.mrb[0].mxu0
      %v606 = vpop.f32.mrb[0].mxu0
      %v607 = vadd.f32 %v474, %v606
      %v608 = vpop.f32.mrb[0].mxu0
      %609 = vdwg.mxu0
      %v610 = vmax.f32 %v548, 0.0
      %v611 = vmax.f32 %v551, 0.0
      %v612 = vmax.f32 %v556, 0.0
      %v613 = vmax.f32 %v559, 0.0
      %v614 = vmax.f32 %v564, 0.0
      %v615 = vmax.f32 %v567, 0.0
      %v616 = vmax.f32 %v572, 0.0
      %v617 = vmax.f32 %v575, 0.0
      %v618 = vmax.f32 %v580, 0.0
      %v619 = vmax.f32 %v583, 0.0
      %v620 = vmax.f32 %v588, 0.0
      %v621 = vmax.f32 %v591, 0.0
      %v622 = vmax.f32 %v596, 0.0
      %v623 = vmax.f32 %v599, 0.0
      %v624 = vmax.f32 %v604, 0.0
      %v625 = vmax.f32 %v607, 0.0
      %v626 = vpack.c.bf16 %v611, %v610
      %v627 = vpack.c.bf16 %v613, %v612
      %v628 = vpack.c.bf16 %v615, %v614
      %v629 = vpack.c.bf16 %v617, %v616
      %v630 = vpack.c.bf16 %v619, %v618
      %v631 = vpack.c.bf16 %v621, %v620
      %v632 = vpack.c.bf16 %v623, %v622
      %v633 = vpack.c.bf16 %v625, %v624
      %v634 = vld [vmem:[%s5] sm:$0xf]
      %v635 = vld [vmem:[%s5 + $0x4] sm:$0xf]
      %v636 = vld [vmem:[%s6] sm:$0x1]
      %v638 = vlaneseq
      %v639 = vshrl.u32 %v638, 7
      %v640 = vsub.s32 0, %v639
      %v641 = vrot.slane %v636, %v640
      %v645 = vunpack.c.l.b16 %v634
      %v646 = vunpack.c.l.b16 %v635
      %v647 = vpack.c.b16 %v646, %v645
      %vm649 = vcmask 130048
      %v651 = vsel %vm649, %v626, 0
      %v654 = vsel %vm649, %v627, 0
      %v657 = vsel %vm649, %v628, 0
      %v660 = vsel %vm649, %v629, 0
      %v663 = vsel %vm649, %v630, 0
      %v666 = vsel %vm649, %v631, 0
      %v669 = vsel %vm649, %v632, 0
      %v672 = vsel %vm649, %v633, 0
      %674 = vmatprep.subr.bf16.mxu0 0
      %675 = vmatpush1.bf16.msra.mxu0 %v647
      %676 = vmatprep.subr.bf16.mxu0 0
      %677 = vmatpush1.bf16.msra.mxu0 0
      %678 = vmatprep.subr.bf16.mxu0 0
      %679 = vmatpush1.bf16.msra.mxu0 0
      %680 = vmatprep.subr.bf16.mxu0 0
      %681 = vmatpush1.bf16.msra.mxu0 0
      %682 = vmatprep.subr.bf16.mxu0 0
      %683 = vmatpush1.bf16.msra.mxu0 0
      %684 = vmatprep.subr.bf16.mxu0 0
      %685 = vmatpush1.bf16.msra.mxu0 0
      %686 = vmatprep.subr.bf16.mxu0 0
      %687 = vmatpush1.bf16.msra.mxu0 0
      %688 = vmatprep.subr.bf16.mxu0 0
      %689 = vmatpush1.bf16.msra.mxu0 0
      %690 = vmatprep.subr.bf16.mxu0 0
      %691 = vmatpush1.bf16.msra.mxu0 0
      %692 = vmatprep.subr.bf16.mxu0 0
      %693 = vmatpush1.bf16.msra.mxu0 0
      %694 = vmatprep.subr.bf16.mxu0 0
      %695 = vmatpush1.bf16.msra.mxu0 0
      %696 = vmatprep.subr.bf16.mxu0 0
      %697 = vmatpush1.bf16.msra.mxu0 0
      %698 = vmatprep.subr.bf16.mxu0 0
      %699 = vmatpush1.bf16.msra.mxu0 0
      %700 = vmatprep.subr.bf16.mxu0 0
      %701 = vmatpush1.bf16.msra.mxu0 0
      %702 = vmatprep.subr.bf16.mxu0 0
      %703 = vmatpush1.bf16.msra.mxu0 0
      %704 = vmatprep.subr.bf16.mxu0 0
      %705 = vmatpush1.bf16.msra.mxu0 0
      %706 = vmatprep.mubr.bf16.mxu0 0
      %707 = vmatmul.mubr.bf16.gmra.mrb[0].mxu0 %v651
      %v708 = vpop.f32.mrb[0].mxu0
      %v709 = vadd.f32 %v641, %v708
      %v710 = vpop.f32.mrb[0].mxu0
      %v711 = vpop.f32.mrb[0].mxu0
      %v712 = vadd.f32 %v641, %v711
      %v713 = vpop.f32.mrb[0].mxu0
      %714 = vmatprep.mubr.bf16.mxu0 0
      %715 = vmatmul.mubr.bf16.gmra.mrb[0].mxu0 %v654
      %v716 = vpop.f32.mrb[0].mxu0
      %v717 = vadd.f32 %v641, %v716
      %v718 = vpop.f32.mrb[0].mxu0
      %v719 = vpop.f32.mrb[0].mxu0
      %v720 = vadd.f32 %v641, %v719
      %v721 = vpop.f32.mrb[0].mxu0
      %722 = vmatprep.mubr.bf16.mxu0 0
      %723 = vmatmul.mubr.bf16.gmra.mrb[0].mxu0 %v657
      %v724 = vpop.f32.mrb[0].mxu0
      %v725 = vadd.f32 %v641, %v724
      %v726 = vpop.f32.mrb[0].mxu0
      %v727 = vpop.f32.mrb[0].mxu0
      %v728 = vadd.f32 %v641, %v727
      %v729 = vpop.f32.mrb[0].mxu0
      %730 = vmatprep.mubr.bf16.mxu0 0
      %731 = vmatmul.mubr.bf16.gmra.mrb[0].mxu0 %v660
      %v732 = vpop.f32.mrb[0].mxu0
      %v733 = vadd.f32 %v641, %v732
      %v734 = vpop.f32.mrb[0].mxu0
      %v735 = vpop.f32.mrb[0].mxu0
      %v736 = vadd.f32 %v641, %v735
      %v737 = vpop.f32.mrb[0].mxu0
      %738 = vmatprep.mubr.bf16.mxu0 0
      %739 = vmatmul.mubr.bf16.gmra.mrb[0].mxu0 %v663
      %v740 = vpop.f32.mrb[0].mxu0
      %v741 = vadd.f32 %v641, %v740
      %v742 = vpop.f32.mrb[0].mxu0
      %v743 = vpop.f32.mrb[0].mxu0
      %v744 = vadd.f32 %v641, %v743
      %v745 = vpop.f32.mrb[0].mxu0
      %746 = vmatprep.mubr.bf16.mxu0 0
      %747 = vmatmul.mubr.bf16.gmra.mrb[0].mxu0 %v666
      %v748 = vpop.f32.mrb[0].mxu0
      %v749 = vadd.f32 %v641, %v748
      %v750 = vpop.f32.mrb[0].mxu0
      %v751 = vpop.f32.mrb[0].mxu0
      %v752 = vadd.f32 %v641, %v751
      %v753 = vpop.f32.mrb[0].mxu0
      %754 = vmatprep.mubr.bf16.mxu0 0
      %755 = vmatmul.mubr.bf16.gmra.mrb[0].mxu0 %v669
      %v756 = vpop.f32.mrb[0].mxu0
      %v757 = vadd.f32 %v641, %v756
      %v758 = vpop.f32.mrb[0].mxu0
      %v759 = vpop.f32.mrb[0].mxu0
      %v760 = vadd.f32 %v641, %v759
      %v761 = vpop.f32.mrb[0].mxu0
      %762 = vmatprep.mubr.bf16.mxu0 0
      %763 = vmatmul.mubr.bf16.gmra.mrb[0].mxu0 %v672
      %v764 = vpop.f32.mrb[0].mxu0
      %v765 = vadd.f32 %v641, %v764
      %v766 = vpop.f32.mrb[0].mxu0
      %v767 = vpop.f32.mrb[0].mxu0
      %v768 = vadd.f32 %v641, %v767
      %v769 = vpop.f32.mrb[0].mxu0
      %770 = vdwg.mxu0
      %771 = vst.msk [vmem:[%s280] sm:$0xff] %vm315, %v709
      %772 = vst.msk [vmem:[%s280 + $0x8] sm:$0xff] %vm315, %v712
      %773 = vst.msk [vmem:[%s280 + $0x10] sm:$0xff] %vm315, %v717
      %774 = vst.msk [vmem:[%s280 + $0x18] sm:$0xff] %vm315, %v720
      %775 = vst.msk [vmem:[%s280 + $0x20] sm:$0xff] %vm315, %v725
      %776 = vst.msk [vmem:[%s280 + $0x28] sm:$0xff] %vm315, %v728
      %777 = vst.msk [vmem:[%s280 + $0x30] sm:$0xff] %vm315, %v733
      %778 = vst.msk [vmem:[%s280 + $0x38] sm:$0xff] %vm315, %v736
      %779 = vst.msk [vmem:[%s280 + $0x40] sm:$0xff] %vm315, %v741
      %780 = vst.msk [vmem:[%s280 + $0x48] sm:$0xff] %vm315, %v744
      %781 = vst.msk [vmem:[%s280 + $0x50] sm:$0xff] %vm315, %v749
      %782 = vst.msk [vmem:[%s280 + $0x58] sm:$0xff] %vm315, %v752
      %783 = vst.msk [vmem:[%s280 + $0x60] sm:$0xff] %vm315, %v757
      %784 = vst.msk [vmem:[%s280 + $0x68] sm:$0xff] %vm315, %v760
      %785 = vst.msk [vmem:[%s280 + $0x70] sm:$0xff] %vm315, %v765
      %786 = vst.msk [vmem:[%s280 + $0x78] sm:$0xff] %vm315, %v768
      %s787 = smul.u32 16, %s18
      %p788 = scmp.lt.s32.totalorder %s787, 31
      %s789 = scalar_select %p788, %s787, 31
      %s790 = smul.addr %s789, 8
      %s791 = scalar_lea.vmem %s7, %s790
      // Predicated region
      $region49: #{tpu_custom_call.1} parent=47 // pred_check
        %p792 = pneg %p188
      $region50: #{tpu_custom_call.1} parent=47 // pred_check_branch
        %794 = sbr.rel (%p792) target = $region52
      $region51: #{tpu_custom_call.1} parent=47 // pred_region
        %s795 = smul.u32 16, %s18
      $region52: #{tpu_custom_call.1} parent=47 // pred_fallthru
        _
    $region48: #{tpu_custom_call.1} parent=5 // pred_fallthru
      _
    %p796 = scmp.le.s32.totalorder 2, %s13
    // Predicated region
    $region53: #{tpu_custom_call.1} parent=5 // pred_check
      %p797 = pneg %p796
    $region54: #{tpu_custom_call.1} parent=5 // pred_check_branch
      %799 = sbr.rel (%p797) target = $region56
    $region55: #{tpu_custom_call.1} parent=5 // pred_region
      %s800 = ssub.s32 %s13, 2
      // Predicated region
      $region57: #{tpu_custom_call.1} parent=55 // pred_check
        %p801 = pneg %p194
      $region58: #{tpu_custom_call.1} parent=55 // pred_check_branch
        %803 = sbr.rel (%p801) target = $region60
      $region59: #{tpu_custom_call.1} parent=55 // pred_region
        %s804 = smul.u32 16, %s19
        %p805 = scmp.lt.s32.totalorder %s804, 31
        %s806 = scalar_select %p805, %s804, 31
        %s807 = smul.addr %s806, 8
        %s808 = scalar_lea.vmem %s7, %s807
      $region60: #{tpu_custom_call.1} parent=55 // pred_fallthru
        _
    $region56: #{tpu_custom_call.1} parent=5 // pred_fallthru
      _
  $region6: #{tpu_custom_call.1} parent=0 // loop_footer
    %s17 = sadd.s32 1, %s13
  $region7: #{tpu_custom_call.1} parent=0 // loop_footer_branch
    %12 = sbr.rel target = $region3
  $region8: #{tpu_custom_call.1} parent=0 // loop_exit
    _

</llo_original>
